<compile_context>
chip_gen: v7x
topology: tpu7x:2x2x1
jax: 0.10.0
libtpu: 0.0.40
codegen_flags: <defaults>
</compile_context>

<pallas_src>
import jax
import jax.numpy as jnp
from jax import lax
from jax.experimental import pallas as pl
from jax.experimental.pallas import tpu as pltpu


# ---------------------------------------------------------------------------
# Chip detection / tile selection
# ---------------------------------------------------------------------------

def _chip_info():
    """Return (generation_tag, vmem_capacity_bytes) for the local TPU."""
    kind = ""
    try:
        kind = jax.devices()[0].device_kind.lower()
    except Exception:
        pass
    if "v7" in kind:
        gen = "v7x"
    elif "v6" in kind:
        gen = "v6e"
    elif "v5e" in kind or "v5 lite" in kind or "v5lite" in kind:
        gen = "v5e"
    else:
        gen = "other"
    vmem = (64 << 20) if gen == "v7x" else (128 << 20)
    try:  # prefer the exact number when the query is available
        vmem = int(pltpu.get_tpu_info().vmem_capacity_bytes)
    except Exception:
        pass
    return gen, vmem


def _pick_tile(total, target, multiple):
    """Largest divisor of `total` that is a multiple of `multiple` and <= target."""
    if total <= target:
        return total
    best = None
    t = multiple
    while t <= target:
        if total % t == 0:
            best = t
        t += multiple
    return best if best is not None else total


def _lane_divisors(total, multiple=128):
    divs = [d for d in range(multiple, total + 1, multiple) if total % d == 0]
    return divs if divs else [total]


def _tile_vmem_bytes(tm, ti, H, b_act, b_w, fused_residual, fused_rmsnorm):
    """Estimated VMEM footprint: double-buffered pipeline tiles + scratch."""
    needs_pre = fused_residual or fused_rmsnorm
    by = 2 * tm * H * b_act                       # x in
    if fused_residual:
        by += 2 * tm * H * b_act                  # residual in
        by += 2 * tm * H * b_act                  # add_out
    if fused_rmsnorm:
        by += 2 * H * b_act                       # ln_w
    by += 2 * H * ti * b_w * 2                    # gate + up weight tiles
    by += 2 * ti * H * b_w                        # down weight tile
    by += 2 * tm * H * b_act                      # out
    if needs_pre:
        by += tm * H * b_w                        # preprocessed-x scratch
    by += tm * H * 4                              # f32 accumulator
    return by


def _select_tiles(M, H, I, b_act, b_w, fused_residual, fused_rmsnorm,
                  sub, gen, vmem_cap, tm_override=None, ti_override=None):
    # Per-generation row-tile target.  Arithmetic intensity per streamed weight
    # byte ~ tm flops/byte; balance points are ~240 (v5e), ~640 (v6e),
    # ~310 per TC (v7x).
    tm_target = {"v5e": 256, "v6e": 768, "v7x": 512}.get(gen, 512)
    tm = tm_override if tm_override is not None else _pick_tile(M, tm_target, sub)

    # v7x has 2 TensorCores sharded along the "parallel" row axis: avoid a
    # single row tile (one TC idle, e.g. decode) when M can be split evenly.
    if (gen == "v7x" and tm_override is None and M // tm < 2
            and M % 2 == 0 and (M // 2) % sub == 0):
        tm = M // 2

    # Intermediate tile: decode (small tm) keeps ti large to amortize the
    # ~0.35us per-grid-step overhead; prefill shrinks ti to free VMEM for the
    # larger row tile (especially on the 64 MiB/TC v7x).
    ti_target = 1024 if tm <= 128 else (256 if gen == "v7x" else 512)

    if ti_override is not None:
        return tm, ti_override

    budget = int(0.75 * vmem_cap)
    tm_cands = sorted({tm} | {d for d in range(sub, tm + 1, sub) if M % d == 0},
                      reverse=True)
    ti_divs = _lane_divisors(I)
    for tm_c in tm_cands:
        cand = [d for d in ti_divs if d <= ti_target] or [min(ti_divs)]
        for ti_c in sorted(cand, reverse=True):
            if _tile_vmem_bytes(tm_c, ti_c, H, b_act, b_w,
                                fused_residual, fused_rmsnorm) <= budget:
                return tm_c, ti_c
    # Nothing fits the soft budget: fall back to the smallest tiles.
    return tm_cands[-1], min(ti_divs)


# ---------------------------------------------------------------------------
# Kernel
# ---------------------------------------------------------------------------

def _make_mlp_kernel(fused_rmsnorm, fused_residual, eps, hidden_size):
    inv_h = 1.0 / float(hidden_size)
    needs_pre = fused_rmsnorm or fused_residual

    def kernel(*refs):
        it = iter(refs)
        x_ref = next(it)                                   # (tm, H)
        res_ref = next(it) if fused_residual else None     # (tm, H)
        ln_ref = next(it) if fused_rmsnorm else None       # (1, H)
        gate_w_ref = next(it)                              # (H, ti)
        up_w_ref = next(it)                                # (H, ti)
        down_w_ref = next(it)                              # (ti, H)
        out_ref = next(it)                                 # (tm, H)
        add_ref = next(it) if fused_residual else None     # (tm, H)
        x_scratch = next(it) if needs_pre else None        # (tm, H) weight dtype
        acc_ref = next(it)                                 # (tm, H) f32

        n = pl.program_id(1)

        @pl.when(n == 0)
        def _init():
            acc_ref[...] = jnp.zeros_like(acc_ref)
            # TODO(synk): hoist this preprocessing off the first-dot critical
            # path (compute row tile i+1's prep during tile i's last n step).
            if needs_pre:
                x = x_ref[...].astype(jnp.float32)
                if fused_residual:
                    x = x + res_ref[...].astype(jnp.float32)
                    add_ref[...] = x.astype(add_ref.dtype)
                if fused_rmsnorm:
                    # sum * (1/H) == mean; rsqrt goes to the EUP.
                    var = jnp.sum(x * x, axis=-1, keepdims=True) * inv_h
                    x = x * lax.rsqrt(var + eps)
                    x = x * ln_ref[...].astype(jnp.float32)
                x_scratch[...] = x.astype(x_scratch.dtype)

        # Activations in the weight dtype -> MXU-native (bf16 x bf16 -> f32).
        if needs_pre:
            xc = x_scratch[...]
        else:
            xc = x_ref[...].astype(gate_w_ref.dtype)

        # Two separate MXU dots; no sliced (tm, 2*ti) f32 intermediate.
        gate = jnp.dot(xc, gate_w_ref[...], preferred_element_type=jnp.float32)
        up = jnp.dot(xc, up_w_ref[...], preferred_element_type=jnp.float32)

        # silu(gate) * up in f32 (sigmoid runs on the EUP).
        h = gate * jax.nn.sigmoid(gate) * up

        # Down-projection partial sum accumulated in the f32 VMEM scratch.
        acc_ref[...] += jnp.dot(h.astype(down_w_ref.dtype), down_w_ref[...],
                                preferred_element_type=jnp.float32)

        @pl.when(n == pl.num_programs(1) - 1)
        def _finalize():
            out_ref[...] = acc_ref[...].astype(out_ref.dtype)

    return kernel


# ---------------------------------------------------------------------------
# Module wrapper
# ---------------------------------------------------------------------------

class NeuronLlamaMLPPallas:
    """Pallas re-implementation of NeuronLlamaMLP (tp_degree=1, kernel path)."""

    def __init__(self, hidden_size, intermediate_size, rms_norm_eps=1e-5,
                 dtype=jnp.float32, seed=0):
        self.hidden_size = hidden_size
        self.intermediate_size = intermediate_size
        self.rms_norm_eps = rms_norm_eps
        self.dtype = dtype
        self._chip, self._vmem_cap = _chip_info()

        key = jax.random.PRNGKey(seed)
        kg, ku, kd = jax.random.split(key, 3)
        scale_h = 1.0 / jnp.sqrt(hidden_size)
        scale_i = 1.0 / jnp.sqrt(intermediate_size)
        # nn.Linear weights are (out, in); kept transposed (in, out), mirroring
        # transpose_parallel_linear_layer.  Each weight is stored exactly once.
        self.gate_w = (jax.random.normal(kg, (hidden_size, intermediate_size),
                                         jnp.float32) * scale_h).astype(dtype)
        self.up_w = (jax.random.normal(ku, (hidden_size, intermediate_size),
                                       jnp.float32) * scale_h).astype(dtype)
        self.down_w = (jax.random.normal(kd, (intermediate_size, hidden_size),
                                         jnp.float32) * scale_i).astype(dtype)

    def _pallas_mlp(self, x2d, ln_w, res2d, fused_rmsnorm, fused_residual, tm, ti):
        M, H = x2d.shape
        I = self.intermediate_size
        assert M % tm == 0 and I % ti == 0
        kernel = _make_mlp_kernel(fused_rmsnorm, fused_residual,
                                  self.rms_norm_eps, H)

        row_spec = pl.BlockSpec((tm, H), lambda i, n: (i, 0))

        in_specs = [row_spec]
        inputs = [x2d]
        if fused_residual:
            in_specs.append(row_spec)
            inputs.append(res2d)
        if fused_rmsnorm:
            in_specs.append(pl.BlockSpec((1, H), lambda i, n: (0, 0)))
            inputs.append(ln_w)
        # TODO(synk): on v5e there is spare VMEM to deepen weight buffering
        # (pipeline_mode=pl.Buffered(3)) to hide DMA jitter on the two streams.
        in_specs.append(pl.BlockSpec((H, ti), lambda i, n: (0, n)))   # gate
        inputs.append(self.gate_w)
        in_specs.append(pl.BlockSpec((H, ti), lambda i, n: (0, n)))   # up
        inputs.append(self.up_w)
        in_specs.append(pl.BlockSpec((ti, H), lambda i, n: (n, 0)))   # down
        inputs.append(self.down_w)

        out_dtype = x2d.dtype
        if fused_residual:
            out_shape = (jax.ShapeDtypeStruct((M, H), out_dtype),
                         jax.ShapeDtypeStruct((M, H), out_dtype))
            out_specs = (row_spec, row_spec)
        else:
            out_shape = jax.ShapeDtypeStruct((M, H), out_dtype)
            out_specs = row_spec

        scratch_shapes = []
        if fused_rmsnorm or fused_residual:
            scratch_shapes.append(pltpu.VMEM((tm, H), self.dtype))   # preprocessed x
        scratch_shapes.append(pltpu.VMEM((tm, H), jnp.float32))      # down-proj acc

        b_act = jnp.dtype(out_dtype).itemsize
        b_w = jnp.dtype(self.dtype).itemsize
        tile_bytes = _tile_vmem_bytes(tm, ti, H, b_act, b_w,
                                      fused_residual, fused_rmsnorm)
        # Cap by the actual chip VMEM (64 MiB/TC on v7x, 128 MiB on v5e/v6e).
        vmem_limit = int(min(max(int(tile_bytes * 1.5) + (4 << 20), 32 << 20),
                             self._vmem_cap - (8 << 20)))

        n_row = M // tm
        flops = 6 * M * H * I
        transcendentals = M * I
        weight_bytes = 3 * H * I * b_w                       # streamed per row tile
        act_bytes = (M * H * b_act * (2 + (2 if fused_residual else 0))
                     + (H * b_act if fused_rmsnorm else 0))
        cost = pl.CostEstimate(flops=flops, transcendentals=transcendentals,
                               bytes_accessed=weight_bytes * n_row + act_bytes)

        return pl.pallas_call(
            kernel,
            out_shape=out_shape,
            grid_spec=pltpu.PrefetchScalarGridSpec(
                num_scalar_prefetch=0,
                grid=(n_row, I // ti),
                in_specs=in_specs,
                out_specs=out_specs,
                scratch_shapes=scratch_shapes,
            ),
            compiler_params=pltpu.CompilerParams(
                dimension_semantics=("parallel", "arbitrary"),
                vmem_limit_bytes=vmem_limit),
            cost_estimate=cost,
        )(*inputs)

    def forward(self, x, rmsnorm_weight=None, residual=None, tm=None, ti=None):
        """Returns (output, residual_add_output) like NeuronLlamaMLP.forward."""
        B, S, H = x.shape
        assert H == self.hidden_size
        M = B * S
        fused_rmsnorm = rmsnorm_weight is not None
        fused_residual = residual is not None

        sub = 16 if (x.dtype == jnp.bfloat16 and M % 16 == 0) else 8
        b_act = jnp.dtype(x.dtype).itemsize
        b_w = jnp.dtype(self.dtype).itemsize
        tm_sel, ti_sel = _select_tiles(
            M, H, self.intermediate_size, b_act, b_w,
            fused_residual, fused_rmsnorm, sub,
            self._chip, self._vmem_cap, tm_override=tm, ti_override=ti)
        assert M % tm_sel == 0, "row tile must divide batch*seq"
        assert self.intermediate_size % ti_sel == 0

        ln_w = (rmsnorm_weight.reshape(1, H).astype(x.dtype)
                if fused_rmsnorm else None)
        x2d = x.reshape(M, H)
        res2d = residual.reshape(M, H) if fused_residual else None

        result = self._pallas_mlp(x2d, ln_w, res2d, fused_rmsnorm,
                                  fused_residual, tm_sel, ti_sel)

        if fused_residual:
            out2d, add2d = result
            return out2d.reshape(B, S, H), add2d.reshape(B, S, H)
        out2d = result
        # tp_degree = 1 -> reduce_from_tensor_model_parallel_region is identity.
        return out2d.reshape(B, S, H), None


# ---------------------------------------------------------------------------
# Pure-JAX reference
# ---------------------------------------------------------------------------

def _reference(x, ln_w, residual, gate_w, up_w, down_w, eps):
    x = x.astype(jnp.float32)
    add_out = None
    if residual is not None:
        x = x + residual.astype(jnp.float32)
        add_out = x
    if ln_w is not None:
        var = jnp.mean(x * x, axis=-1, keepdims=True)
        x = x * lax.rsqrt(var + eps) * ln_w.astype(jnp.float32)
    g = x @ gate_w.astype(jnp.float32)
    u = x @ up_w.astype(jnp.float32)
    h = jax.nn.silu(g) * u
    return h @ down_w.astype(jnp.float32), add_out


if __name__ == "__main__":
    # Small TPU-layout-friendly shapes; forced tiles exercise a (2, 2) grid.
    B, S, H, I = 2, 8, 128, 256
    key = jax.random.PRNGKey(0)
    kx, kr, kw = jax.random.split(key, 3)
    x = jax.random.normal(kx, (B, S, H), jnp.float32)
    residual = jax.random.normal(kr, (B, S, H), jnp.float32)
    ln_weight = 1.0 + 0.1 * jax.random.normal(kw, (H,), jnp.float32)

    # --- f32 module: tight numeric check (fused + plain paths) ---
    mlp32 = NeuronLlamaMLPPallas(hidden_size=H, intermediate_size=I,
                                 rms_norm_eps=1e-5, dtype=jnp.float32, seed=0)
    out, res_out = mlp32.forward(x, rmsnorm_weight=ln_weight, residual=residual,
                                 tm=8, ti=128)
    out_plain, res_plain = mlp32.forward(x)        # auto-selected tiles
    jax.block_until_ready((out, res_out, out_plain))
    assert res_plain is None

    ref_out, ref_add = _reference(x, ln_weight, residual,
                                  mlp32.gate_w, mlp32.up_w, mlp32.down_w, 1e-5)
    ref_plain, _ = _reference(x, None, None,
                              mlp32.gate_w, mlp32.up_w, mlp32.down_w, 1e-5)
    assert jnp.allclose(out, ref_out, atol=2e-4, rtol=2e-4)
    assert jnp.allclose(res_out, ref_add, atol=1e-5, rtol=1e-5)
    assert jnp.allclose(out_plain, ref_plain, atol=2e-4, rtol=2e-4)

    # --- bf16 module: production MXU-native path, loose tolerance ---
    mlp16 = NeuronLlamaMLPPallas(hidden_size=H, intermediate_size=I,
                                 rms_norm_eps=1e-5, dtype=jnp.bfloat16, seed=0)
    xb = x.astype(jnp.bfloat16)
    rb = residual.astype(jnp.bfloat16)
    lb = ln_weight.astype(jnp.bfloat16)
    out16, add16 = mlp16.forward(xb, rmsnorm_weight=lb, residual=rb)
    jax.block_until_ready((out16, add16))
    ref16, refadd16 = _reference(xb, lb, rb,
                                 mlp16.gate_w, mlp16.up_w, mlp16.down_w, 1e-5)
    assert jnp.allclose(out16.astype(jnp.float32), ref16, atol=1e-1, rtol=1e-1)
    assert jnp.allclose(add16.astype(jnp.float32), refadd16.astype(jnp.float32),
                        atol=2e-2, rtol=2e-2)

    print("KERNEL_OK")
</pallas_src>

<mosaic_0001>
module attributes {stable_mosaic.version = 11 : i64} {
  func.func @kernel(%arg0: i32, %arg1: i32, %arg2: memref<8x128xf32, #tpu.memory_space<vmem>>, %arg3: memref<8x128xf32, #tpu.memory_space<vmem>>, %arg4: memref<1x128xf32, #tpu.memory_space<vmem>>, %arg5: memref<128x128xf32, #tpu.memory_space<vmem>>, %arg6: memref<128x128xf32, #tpu.memory_space<vmem>>, %arg7: memref<128x128xf32, #tpu.memory_space<vmem>>, %arg8: memref<8x128xf32, #tpu.memory_space<vmem>>, %arg9: memref<8x128xf32, #tpu.memory_space<vmem>>, %arg10: memref<8x128xf32, #tpu.memory_space<vmem>>, %arg11: memref<8x128xf32, #tpu.memory_space<vmem>>) attributes {dimension_semantics = [#tpu.dimension_semantics<parallel>, #tpu.dimension_semantics<arbitrary>], iteration_bounds = array<i64: 2, 2>, scalar_prefetch = 0 : i64, scratch_operands = 2 : i64, tpu.core_type = #tpu.core_type<tc>, window_params = [{transform_indices = @transform_0, window_bounds = array<i64: 8, 128>}, {transform_indices = @transform_1, window_bounds = array<i64: 8, 128>}, {pipeline_mode = #tpu.pipeline_mode<synchronous>, transform_indices = @transform_2, window_bounds = array<i64: 1, 128>}, {transform_indices = @transform_3, window_bounds = array<i64: 128, 128>}, {transform_indices = @transform_4, window_bounds = array<i64: 128, 128>}, {transform_indices = @transform_5, window_bounds = array<i64: 128, 128>}, {transform_indices = @transform_6, window_bounds = array<i64: 8, 128>}, {transform_indices = @transform_7, window_bounds = array<i64: 8, 128>}]} {
    %c0_i32 = arith.constant 0 : i32
    %0 = arith.cmpi eq, %arg1, %c0_i32 : i32
    %1 = arith.extui %0 : i1 to i32
    %c0_i32_0 = arith.constant 0 : i32
    %2 = arith.cmpi ne, %1, %c0_i32_0 : i32
    scf.if %2 {
      %cst_16 = arith.constant 0.000000e+00 : f32
      %23 = vector.broadcast %cst_16 : f32 to vector<8x128xf32>
      %c0_17 = arith.constant 0 : index
      %c0_18 = arith.constant 0 : index
      %24 = vector.load %arg11[%c0_17, %c0_18] : memref<8x128xf32, #tpu.memory_space<vmem>>, vector<8x128xf32>
      tpu.vector_store %arg11[%c0_17, %c0_18], %23 {strides = array<i32>} : memref<8x128xf32, #tpu.memory_space<vmem>>, vector<8x128xf32>,
      %c0_19 = arith.constant 0 : index
      %c0_20 = arith.constant 0 : index
      %25 = vector.load %arg2[%c0_19, %c0_20] : memref<8x128xf32, #tpu.memory_space<vmem>>, vector<8x128xf32>
      %c0_21 = arith.constant 0 : index
      %c0_22 = arith.constant 0 : index
      %26 = vector.load %arg3[%c0_21, %c0_22] : memref<8x128xf32, #tpu.memory_space<vmem>>, vector<8x128xf32>
      %27 = arith.addf %25, %26 : vector<8x128xf32>
      %c0_23 = arith.constant 0 : index
      %c0_24 = arith.constant 0 : index
      %28 = vector.load %arg9[%c0_23, %c0_24] : memref<8x128xf32, #tpu.memory_space<vmem>>, vector<8x128xf32>
      tpu.vector_store %arg9[%c0_23, %c0_24], %27 {strides = array<i32>} : memref<8x128xf32, #tpu.memory_space<vmem>>, vector<8x128xf32>,
      %29 = arith.mulf %27, %27 : vector<8x128xf32>
      %cst_25 = arith.constant dense<0.000000e+00> : vector<8xf32>
      %30 = vector.multi_reduction <add>, %29, %cst_25 [1] : vector<8x128xf32> to vector<8xf32>
      %31 = vector.shape_cast %30 : vector<8xf32> to vector<8x1xf32>
      %cst_26 = arith.constant 7.812500e-03 : f32
      %32 = vector.broadcast %cst_26 : f32 to vector<8x1xf32>
      %33 = arith.mulf %31, %32 : vector<8x1xf32>
      %cst_27 = arith.constant 9.99999974E-6 : f32
      %34 = vector.broadcast %cst_27 : f32 to vector<8x1xf32>
      %35 = arith.addf %33, %34 : vector<8x1xf32>
      %36 = math.rsqrt %35 : vector<8x1xf32>
      %37 = vector.broadcast %36 : vector<8x1xf32> to vector<8x128xf32>
      %38 = arith.mulf %27, %37 : vector<8x128xf32>
      %c0_28 = arith.constant 0 : index
      %c0_29 = arith.constant 0 : index
      %39 = vector.load %arg4[%c0_28, %c0_29] : memref<1x128xf32, #tpu.memory_space<vmem>>, vector<1x128xf32>
      %40 = vector.broadcast %39 : vector<1x128xf32> to vector<8x128xf32>
      %41 = arith.mulf %38, %40 : vector<8x128xf32>
      %c0_30 = arith.constant 0 : index
      %c0_31 = arith.constant 0 : index
      %42 = vector.load %arg10[%c0_30, %c0_31] : memref<8x128xf32, #tpu.memory_space<vmem>>, vector<8x128xf32>
      tpu.vector_store %arg10[%c0_30, %c0_31], %41 {strides = array<i32>} : memref<8x128xf32, #tpu.memory_space<vmem>>, vector<8x128xf32>,
    } else {
    }
    %c0 = arith.constant 0 : index
    %c0_1 = arith.constant 0 : index
    %3 = vector.load %arg10[%c0, %c0_1] : memref<8x128xf32, #tpu.memory_space<vmem>>, vector<8x128xf32>
    %c0_2 = arith.constant 0 : index
    %c0_3 = arith.constant 0 : index
    %4 = vector.load %arg5[%c0_2, %c0_3] : memref<128x128xf32, #tpu.memory_space<vmem>>, vector<128x128xf32>
    %cst = arith.constant dense<0.000000e+00> : vector<8x128xf32>
    %5 = tpu.matmul %3, %4, %cst {dimension_numbers = #tpu.dot_dimension_numbers<[1], [0], [0], [1], [0, 0, 1, 1], [], []>} : vector<8x128xf32>, vector<128x128xf32>, vector<8x128xf32> -> vector<8x128xf32>
    %c0_4 = arith.constant 0 : index
    %c0_5 = arith.constant 0 : index
    %6 = vector.load %arg6[%c0_4, %c0_5] : memref<128x128xf32, #tpu.memory_space<vmem>>, vector<128x128xf32>
    %cst_6 = arith.constant dense<0.000000e+00> : vector<8x128xf32>
    %7 = tpu.matmul %3, %6, %cst_6 {dimension_numbers = #tpu.dot_dimension_numbers<[1], [0], [0], [1], [0, 0, 1, 1], [], []>} : vector<8x128xf32>, vector<128x128xf32>, vector<8x128xf32> -> vector<8x128xf32>
    %8 = arith.negf %5 : vector<8x128xf32>
    %9 = math.exp %8 : vector<8x128xf32>
    %cst_7 = arith.constant 1.000000e+00 : f32
    %10 = vector.broadcast %cst_7 : f32 to vector<8x128xf32>
    %11 = arith.addf %10, %9 : vector<8x128xf32>
    %12 = arith.divf %10, %11 : vector<8x128xf32>
    %13 = arith.mulf %5, %12 : vector<8x128xf32>
    %14 = arith.mulf %13, %7 : vector<8x128xf32>
    %c0_8 = arith.constant 0 : index
    %c0_9 = arith.constant 0 : index
    %15 = vector.load %arg11[%c0_8, %c0_9] : memref<8x128xf32, #tpu.memory_space<vmem>>, vector<8x128xf32>
    %c0_10 = arith.constant 0 : index
    %c0_11 = arith.constant 0 : index
    %16 = vector.load %arg7[%c0_10, %c0_11] : memref<128x128xf32, #tpu.memory_space<vmem>>, vector<128x128xf32>
    %cst_12 = arith.constant dense<0.000000e+00> : vector<8x128xf32>
    %17 = tpu.matmul %14, %16, %cst_12 {dimension_numbers = #tpu.dot_dimension_numbers<[1], [0], [0], [1], [0, 0, 1, 1], [], []>} : vector<8x128xf32>, vector<128x128xf32>, vector<8x128xf32> -> vector<8x128xf32>
    %18 = arith.addf %15, %17 : vector<8x128xf32>
    %c0_13 = arith.constant 0 : index
    %c0_14 = arith.constant 0 : index
    %19 = vector.load %arg11[%c0_13, %c0_14] : memref<8x128xf32, #tpu.memory_space<vmem>>, vector<8x128xf32>
    tpu.vector_store %arg11[%c0_13, %c0_14], %18 {strides = array<i32>} : memref<8x128xf32, #tpu.memory_space<vmem>>, vector<8x128xf32>,
    %c1_i32 = arith.constant 1 : i32
    %20 = arith.cmpi eq, %arg1, %c1_i32 : i32
    %21 = arith.extui %20 : i1 to i32
    %c0_i32_15 = arith.constant 0 : i32
    %22 = arith.cmpi ne, %21, %c0_i32_15 : i32
    scf.if %22 {
      %c0_16 = arith.constant 0 : index
      %c0_17 = arith.constant 0 : index
      %23 = vector.load %arg11[%c0_16, %c0_17] : memref<8x128xf32, #tpu.memory_space<vmem>>, vector<8x128xf32>
      %c0_18 = arith.constant 0 : index
      %c0_19 = arith.constant 0 : index
      %24 = vector.load %arg8[%c0_18, %c0_19] : memref<8x128xf32, #tpu.memory_space<vmem>>, vector<8x128xf32>
      tpu.vector_store %arg8[%c0_18, %c0_19], %23 {strides = array<i32>} : memref<8x128xf32, #tpu.memory_space<vmem>>, vector<8x128xf32>,
    } else {
    }
    return
  }
  func.func @transform_0(%arg0: i32, %arg1: i32) -> (i32, i32) {
    %c0_i32 = arith.constant 0 : i32
    %c0_i32_0 = arith.constant 0 : i32
    return %arg0, %c0_i32 : i32, i32
  }
  func.func @transform_1(%arg0: i32, %arg1: i32) -> (i32, i32) {
    %c0_i32 = arith.constant 0 : i32
    %c0_i32_0 = arith.constant 0 : i32
    return %arg0, %c0_i32 : i32, i32
  }
  func.func @transform_2(%arg0: i32, %arg1: i32) -> (i32, i32) {
    %c0_i32 = arith.constant 0 : i32
    %c0_i32_0 = arith.constant 0 : i32
    %c0_i32_1 = arith.constant 0 : i32
    return %c0_i32, %c0_i32_0 : i32, i32
  }
  func.func @transform_3(%arg0: i32, %arg1: i32) -> (i32, i32) {
    %c0_i32 = arith.constant 0 : i32
    %c0_i32_0 = arith.constant 0 : i32
    return %c0_i32, %arg1 : i32, i32
  }
  func.func @transform_4(%arg0: i32, %arg1: i32) -> (i32, i32) {
    %c0_i32 = arith.constant 0 : i32
    %c0_i32_0 = arith.constant 0 : i32
    return %c0_i32, %arg1 : i32, i32
  }
  func.func @transform_5(%arg0: i32, %arg1: i32) -> (i32, i32) {
    %c0_i32 = arith.constant 0 : i32
    %c0_i32_0 = arith.constant 0 : i32
    return %arg1, %c0_i32 : i32, i32
  }
  func.func @transform_6(%arg0: i32, %arg1: i32) -> (i32, i32) {
    %c0_i32 = arith.constant 0 : i32
    %c0_i32_0 = arith.constant 0 : i32
    return %arg0, %c0_i32 : i32, i32
  }
  func.func @transform_7(%arg0: i32, %arg1: i32) -> (i32, i32) {
    %c0_i32 = arith.constant 0 : i32
    %c0_i32_0 = arith.constant 0 : i32
    return %arg0, %c0_i32 : i32, i32
  }
}

</mosaic_0001>

<llo_original>
// kernel: tpu_custom_call.1
$region0: #{tpu_custom_call.1}
  #allocation0 [shape = 'u32[]', space=smem, size = 0x4, offset = 0x4, fixed_abs, tag = 'smem constant byte address 0x4 - core index']
  #allocation1 [shape = 'u32[144,128]{1,0:T(1,128)}', space=vmem, size = 0x12000, scoped, tag = 'internal scratch']
  #allocation2 [shape = 'f32[8,128]{1,0:T(8,128)}', space=vmem, size = 0x1000, scoped, tag = 'scratch operand']
  #allocation3 [shape = 'f32[8,128]{1,0:T(8,128)}', space=vmem, size = 0x1000, scoped, tag = 'scratch operand']
  %s0 = inlined_call_operand.hbm [shape: f32[16,128], index: 0, kind: input, shape index: {}]
  %s1 = inlined_call_operand.hbm [shape: f32[16,128], index: 1, kind: input, shape index: {}]
  %s2 = inlined_call_operand.vmem [shape: f32[1,128], index: 2, kind: input, shape index: {}]
  %s3 = inlined_call_operand.hbm [shape: f32[128,256], index: 3, kind: input, shape index: {}]
  %s4 = inlined_call_operand.hbm [shape: f32[128,256], index: 4, kind: input, shape index: {}]
  %s5 = inlined_call_operand.hbm [shape: f32[256,128], index: 5, kind: input, shape index: {}]
  %s6 = inlined_call_operand.hbm [shape: f32[16,128], index: 6, kind: output, shape index: {0}]
  %s7 = inlined_call_operand.hbm [shape: f32[16,128], index: 7, kind: output, shape index: {1}]
  %8 = xla_tuple %s6, %s7
  %s9 = sld [smem:[#allocation0]]
  $region93: #{tpu_custom_call.1} parent=0
    _
  %s11 = ssub.s32 1, %s9
  %s12 = scalar_select 0, %s11, %s9
  $region1: #{tpu_custom_call.1} parent=0
    #allocation4 [shape = 'u8[8192]{0}', space=vmem, size = 0x2000, scoped, tag = 'input window, operand 0']
    #allocation5 [shape = 's32[2]{0}', space=sflag, size = 0x8, scoped, tag = 'scoped memory for tpu_custom_call.1']
    #allocation6 [shape = 's32[2]{0}', space=sflag, size = 0x8, scoped, tag = 'scoped memory for tpu_custom_call.1']
    #allocation7 [shape = 'u8[8192]{0}', space=vmem, size = 0x2000, scoped, tag = 'input window, operand 1']
    #allocation8 [shape = 's32[2]{0}', space=sflag, size = 0x8, scoped, tag = 'scoped memory for tpu_custom_call.1']
    #allocation9 [shape = 'u8[131072]{0}', space=vmem, size = 0x20000, scoped, tag = 'input window, operand 3']
    #allocation10 [shape = 'u8[131072]{0}', space=vmem, size = 0x20000, scoped, tag = 'input window, operand 4']
    #allocation11 [shape = 's32[2]{0}', space=sflag, size = 0x8, scoped, tag = 'scoped memory for tpu_custom_call.1']
    #allocation12 [shape = 'u8[131072]{0}', space=vmem, size = 0x20000, scoped, tag = 'input window, operand 5']
    #allocation13 [shape = 'u8[8192]{0}', space=vmem, size = 0x2000, scoped, tag = 'output window, operand 0']
    #allocation14 [shape = 'u8[8192]{0}', space=vmem, size = 0x2000, scoped, tag = 'output window, operand 1']
    #allocation15 [shape = 's32[2]{0}', space=sflag, size = 0x8, scoped, tag = 'scoped memory for tpu_custom_call.1']
    %13 = vsyncpa [#allocation5], 0
    %s14 = scalar_lea.sflag [#allocation5], 1
    %15 = vsyncpa %s14, 0
    %16 = vsyncpa [#allocation8], 0
    %s17 = scalar_lea.sflag [#allocation8], 1
    %18 = vsyncpa %s17, 0
    %19 = vsyncpa [#allocation11], 0
    %s20 = scalar_lea.sflag [#allocation11], 1
    %21 = vsyncpa %s20, 0
    %22 = vsyncpa [#allocation6], 0
    %s23 = scalar_lea.sflag [#allocation6], 1
    %24 = vsyncpa %s23, 0
    %25 = vsyncpa [#allocation15], 0
    %s26 = scalar_lea.sflag [#allocation15], 1
    %27 = vsyncpa %s26, 0
    loop: start=0, step=1, limit=6
    $region2: #{tpu_custom_call.1} parent=1 // loop_pre_header
      _
    $region3: #{tpu_custom_call.1} parent=1 // loop_header
      %s29 = sphi 0, %s33
      %p30 = scmp.ge.s32.totalorder %s29, 6
      %s36 = sphi 0, %s48
      %s37 = sphi 0, %s44
      %s38 = sphi 0, %s36
      %s39 = sphi 0, %s37
      %s40 = sphi 0, %s38
      %s41 = sphi 0, %s39
      %s51 = sphi 0, %s53
      %s54 = sphi 0, %s51
      %s55 = sphi 0, %s54
      %s71 = sphi 0, %s55
      %s77 = sphi 0, %s79
      %s80 = sphi 0, %s77
      %s81 = sphi 0, %s80
      %s97 = sphi 0, %s81
      %s101 = sphi 0, %s101
      %s103 = sphi 0, %s101
      %s104 = sphi 0, %s103
      %s118 = sphi 0, %s104
      %s124 = sphi 0, %s126
      %s127 = sphi 0, %s124
      %s128 = sphi 0, %s127
      %s144 = sphi 0, %s128
      %s150 = sphi 0, %s152
      %s153 = sphi 0, %s150
      %s154 = sphi 0, %s153
      %s170 = sphi 0, %s154
      %s176 = sphi 0, %s178
      %s179 = sphi 0, %s176
      %s180 = sphi 0, %s179
      %s196 = sphi 0, %s180
      %s202 = sphi 0, %s204
      %s205 = sphi 0, %s202
      %s206 = sphi 0, %s205
      %s222 = sphi 0, %s206
      %s228 = sphi 0, %s230
      %s231 = sphi 0, %s228
      %s232 = sphi 0, %s231
      %s248 = sphi 0, %s232
    $region4: #{tpu_custom_call.1} parent=1 // loop_header_branch
      %32 = sbr.rel (%p30) target = $region8
    $region5: #{tpu_custom_call.1} parent=1 // loop_body
      %s34 = ssub.s32 %s29, 1
      %s35 = ssub.s32 %s29, 2
      %s42 = sadd.s32 1, %s37
      %p43 = scmp.ge.s32.totalorder %s42, 2
      %s44 = scalar_select %p43, 0, %s42
      %s45 = sadd.s32 1, %s36
      %s46 = scalar_select %p43, %s45, %s36
      %p47 = scmp.ge.s32.totalorder %s46, 2
      %s48 = scalar_select %p47, 0, %s46
      %s49 = ssub.s32 %s36, %s48
      %p50 = scmp.eq.s32.totalorder %s49, 0
      %s52 = sadd.s32 %s51, 1
      %s53 = scalar_select %p50, %s51, %s52
      %p56 = pneg %p50
      %p57 = scmp.eq.s32.totalorder %s29, 3
      %p58 = por %p56, %p57
      %p59 = scmp.ne.s32.totalorder %s51, %s54
      %p60 = scmp.eq.s32.totalorder %s29, 0
      %p61 = por %p59, %p60
      %p62 = scmp.ne.s32.totalorder %s51, %s54
      %p63 = scmp.eq.s32.totalorder %s34, 3
      %p64 = por %p62, %p63
      %p65 = scmp.ne.s32.totalorder %s54, %s55
      %p66 = scmp.eq.s32.totalorder %s34, 0
      %p67 = por %p65, %p66
      %p68 = scmp.ne.s32.totalorder %s54, %s55
      %p69 = scmp.eq.s32.totalorder %s35, 3
      %p70 = por %p68, %p69
      %p72 = scmp.ne.s32.totalorder %s55, %s71
      %p73 = scmp.eq.s32.totalorder %s35, 0
      %p74 = por %p72, %p73
      %s75 = ssub.s32 %s36, %s48
      %p76 = scmp.eq.s32.totalorder %s75, 0
      %s78 = sadd.s32 %s77, 1
      %s79 = scalar_select %p76, %s77, %s78
      %p82 = pneg %p76
      %p83 = scmp.eq.s32.totalorder %s29, 3
      %p84 = por %p82, %p83
      %p85 = scmp.ne.s32.totalorder %s77, %s80
      %p86 = scmp.eq.s32.totalorder %s29, 0
      %p87 = por %p85, %p86
      %p88 = scmp.ne.s32.totalorder %s77, %s80
      %p89 = scmp.eq.s32.totalorder %s34, 3
      %p90 = por %p88, %p89
      %p91 = scmp.ne.s32.totalorder %s80, %s81
      %p92 = scmp.eq.s32.totalorder %s34, 0
      %p93 = por %p91, %p92
      %p94 = scmp.ne.s32.totalorder %s80, %s81
      %p95 = scmp.eq.s32.totalorder %s35, 3
      %p96 = por %p94, %p95
      %p98 = scmp.ne.s32.totalorder %s81, %s97
      %p99 = scmp.eq.s32.totalorder %s35, 0
      %p100 = por %p98, %p99
      %s102 = sadd.s32 %s101, 1
      %p105 = scmp.eq.s32.totalorder %s29, 3
      %p106 = scmp.ne.s32.totalorder %s101, %s103
      %p107 = scmp.eq.s32.totalorder %s29, 0
      %p108 = por %p106, %p107
      %p109 = scmp.ne.s32.totalorder %s101, %s103
      %p110 = scmp.eq.s32.totalorder %s34, 3
      %p111 = por %p109, %p110
      %p112 = scmp.ne.s32.totalorder %s103, %s104
      %p113 = scmp.eq.s32.totalorder %s34, 0
      %p114 = por %p112, %p113
      %p115 = scmp.ne.s32.totalorder %s103, %s104
      %p116 = scmp.eq.s32.totalorder %s35, 3
      %p117 = por %p115, %p116
      %p119 = scmp.ne.s32.totalorder %s104, %s118
      %p120 = scmp.eq.s32.totalorder %s35, 0
      %p121 = por %p119, %p120
      %s122 = ssub.s32 %s37, %s44
      %p123 = scmp.eq.s32.totalorder %s122, 0
      %s125 = sadd.s32 %s124, 1
      %s126 = scalar_select %p123, %s124, %s125
      %p129 = pneg %p123
      %p130 = scmp.eq.s32.totalorder %s29, 3
      %p131 = por %p129, %p130
      %p132 = scmp.ne.s32.totalorder %s124, %s127
      %p133 = scmp.eq.s32.totalorder %s29, 0
      %p134 = por %p132, %p133
      %p135 = scmp.ne.s32.totalorder %s124, %s127
      %p136 = scmp.eq.s32.totalorder %s34, 3
      %p137 = por %p135, %p136
      %p138 = scmp.ne.s32.totalorder %s127, %s128
      %p139 = scmp.eq.s32.totalorder %s34, 0
      %p140 = por %p138, %p139
      %p141 = scmp.ne.s32.totalorder %s127, %s128
      %p142 = scmp.eq.s32.totalorder %s35, 3
      %p143 = por %p141, %p142
      %p145 = scmp.ne.s32.totalorder %s128, %s144
      %p146 = scmp.eq.s32.totalorder %s35, 0
      %p147 = por %p145, %p146
      %s148 = ssub.s32 %s37, %s44
      %p149 = scmp.eq.s32.totalorder %s148, 0
      %s151 = sadd.s32 %s150, 1
      %s152 = scalar_select %p149, %s150, %s151
      %p155 = pneg %p149
      %p156 = scmp.eq.s32.totalorder %s29, 3
      %p157 = por %p155, %p156
      %p158 = scmp.ne.s32.totalorder %s150, %s153
      %p159 = scmp.eq.s32.totalorder %s29, 0
      %p160 = por %p158, %p159
      %p161 = scmp.ne.s32.totalorder %s150, %s153
      %p162 = scmp.eq.s32.totalorder %s34, 3
      %p163 = por %p161, %p162
      %p164 = scmp.ne.s32.totalorder %s153, %s154
      %p165 = scmp.eq.s32.totalorder %s34, 0
      %p166 = por %p164, %p165
      %p167 = scmp.ne.s32.totalorder %s153, %s154
      %p168 = scmp.eq.s32.totalorder %s35, 3
      %p169 = por %p167, %p168
      %p171 = scmp.ne.s32.totalorder %s154, %s170
      %p172 = scmp.eq.s32.totalorder %s35, 0
      %p173 = por %p171, %p172
      %s174 = ssub.s32 %s37, %s44
      %p175 = scmp.eq.s32.totalorder %s174, 0
      %s177 = sadd.s32 %s176, 1
      %s178 = scalar_select %p175, %s176, %s177
      %p181 = pneg %p175
      %p182 = scmp.eq.s32.totalorder %s29, 3
      %p183 = por %p181, %p182
      %p184 = scmp.ne.s32.totalorder %s176, %s179
      %p185 = scmp.eq.s32.totalorder %s29, 0
      %p186 = por %p184, %p185
      %p187 = scmp.ne.s32.totalorder %s176, %s179
      %p188 = scmp.eq.s32.totalorder %s34, 3
      %p189 = por %p187, %p188
      %p190 = scmp.ne.s32.totalorder %s179, %s180
      %p191 = scmp.eq.s32.totalorder %s34, 0
      %p192 = por %p190, %p191
      %p193 = scmp.ne.s32.totalorder %s179, %s180
      %p194 = scmp.eq.s32.totalorder %s35, 3
      %p195 = por %p193, %p194
      %p197 = scmp.ne.s32.totalorder %s180, %s196
      %p198 = scmp.eq.s32.totalorder %s35, 0
      %p199 = por %p197, %p198
      %s200 = ssub.s32 %s36, %s48
      %p201 = scmp.eq.s32.totalorder %s200, 0
      %s203 = sadd.s32 %s202, 1
      %s204 = scalar_select %p201, %s202, %s203
      %p207 = pneg %p201
      %p208 = scmp.eq.s32.totalorder %s29, 3
      %p209 = por %p207, %p208
      %p210 = scmp.ne.s32.totalorder %s202, %s205
      %p211 = scmp.eq.s32.totalorder %s29, 0
      %p212 = por %p210, %p211
      %p213 = scmp.ne.s32.totalorder %s202, %s205
      %p214 = scmp.eq.s32.totalorder %s34, 3
      %p215 = por %p213, %p214
      %p216 = scmp.ne.s32.totalorder %s205, %s206
      %p217 = scmp.eq.s32.totalorder %s34, 0
      %p218 = por %p216, %p217
      %p219 = scmp.ne.s32.totalorder %s205, %s206
      %p220 = scmp.eq.s32.totalorder %s35, 3
      %p221 = por %p219, %p220
      %p223 = scmp.ne.s32.totalorder %s206, %s222
      %p224 = scmp.eq.s32.totalorder %s35, 0
      %p225 = por %p223, %p224
      %s226 = ssub.s32 %s36, %s48
      %p227 = scmp.eq.s32.totalorder %s226, 0
      %s229 = sadd.s32 %s228, 1
      %s230 = scalar_select %p227, %s228, %s229
      %p233 = pneg %p227
      %p234 = scmp.eq.s32.totalorder %s29, 3
      %p235 = por %p233, %p234
      %p236 = scmp.ne.s32.totalorder %s228, %s231
      %p237 = scmp.eq.s32.totalorder %s29, 0
      %p238 = por %p236, %p237
      %p239 = scmp.ne.s32.totalorder %s228, %s231
      %p240 = scmp.eq.s32.totalorder %s34, 3
      %p241 = por %p239, %p240
      %p242 = scmp.ne.s32.totalorder %s231, %s232
      %p243 = scmp.eq.s32.totalorder %s34, 0
      %p244 = por %p242, %p243
      %p245 = scmp.ne.s32.totalorder %s231, %s232
      %p246 = scmp.eq.s32.totalorder %s35, 3
      %p247 = por %p245, %p246
      %p249 = scmp.ne.s32.totalorder %s232, %s248
      %p250 = scmp.eq.s32.totalorder %s35, 0
      %p251 = por %p249, %p250
      %p252 = scmp.le.s32.totalorder 1, %s29
      %p253 = scmp.lt.s32.totalorder %s29, 5
      %p254 = pnand %p252, %p253
      %p255 = pneg %p254
      // Predicated region
      $region9: #{tpu_custom_call.1} parent=5 // pred_check
        _
      $region10: #{tpu_custom_call.1} parent=5 // pred_check_branch
        %257 = sbr.rel (%p254) target = $region12
      $region11: #{tpu_custom_call.1} parent=5 // pred_region
        %s258 = ssub.s32 %s29, 1
        // Predicated region
        $region13: #{tpu_custom_call.1} parent=11 // pred_check
          %p259 = pneg %p114
        $region14: #{tpu_custom_call.1} parent=11 // pred_check_branch
          %261 = sbr.rel (%p259) target = $region16
        $region15: #{tpu_custom_call.1} parent=11 // pred_region
          _
        $region16: #{tpu_custom_call.1} parent=11 // pred_fallthru
          _
      $region12: #{tpu_custom_call.1} parent=5 // pred_fallthru
        _
      %p262 = scmp.lt.s32.totalorder %s29, 4
      // Predicated region
      $region17: #{tpu_custom_call.1} parent=5 // pred_check
        %p263 = pneg %p262
      $region18: #{tpu_custom_call.1} parent=5 // pred_check_branch
        %265 = sbr.rel (%p263) target = $region20
      $region19: #{tpu_custom_call.1} parent=5 // pred_region
        // Predicated region
        $region21: #{tpu_custom_call.1} parent=19 // pred_check
          %p266 = pneg %p61
        $region22: #{tpu_custom_call.1} parent=19 // pred_check_branch
          %268 = sbr.rel (%p266) target = $region24
        $region23: #{tpu_custom_call.1} parent=19 // pred_region
          %s269 = sand.u32 %s51, 1
          %s270 = scalar_lea.sflag [#allocation5], %s269
          %s271 = sand.u32 %s51, 1
          %s272 = smul.addr %s271, 8
          %s273 = scalar_lea.vmem [#allocation4], %s272
          %s275 = ssub.s32 128, 128
          %276 = vsyncadd %s270, %s275
          %s277 = smul.addr %s36, 128
          %s278 = scalar_lea.hbm %s0, %s277
          %s280 = sshll.u32 %s273, 4
          %s281 = int_to_ptr.vmem [resolvable:$true] %s280
          %283 = dma.hbm_to_vmem [thread:$0]  %s278, 128, %s281, %s270
        $region24: #{tpu_custom_call.1} parent=19 // pred_fallthru
          _
        // Predicated region
        $region25: #{tpu_custom_call.1} parent=19 // pred_check
          %p284 = pneg %p87
        $region26: #{tpu_custom_call.1} parent=19 // pred_check_branch
          %286 = sbr.rel (%p284) target = $region28
        $region27: #{tpu_custom_call.1} parent=19 // pred_region
          %s287 = sand.u32 %s29, 1
          %s288 = scalar_lea.sflag [#allocation8], %s287
          %s289 = sand.u32 %s77, 1
          %s290 = smul.addr %s289, 8
          %s291 = scalar_lea.vmem [#allocation7], %s290
          %s293 = ssub.s32 128, 128
          %294 = vsyncadd %s288, %s293
          %s295 = smul.addr %s36, 128
          %s296 = scalar_lea.hbm %s1, %s295
          %s298 = sshll.u32 %s291, 4
          %s299 = int_to_ptr.vmem [resolvable:$true] %s298
          %301 = dma.hbm_to_vmem [thread:$0]  %s296, 128, %s299, %s288
        $region28: #{tpu_custom_call.1} parent=19 // pred_fallthru
          _
        // Predicated region
        $region29: #{tpu_custom_call.1} parent=19 // pred_check
          %p302 = pneg %p134
        $region30: #{tpu_custom_call.1} parent=19 // pred_check_branch
          %304 = sbr.rel (%p302) target = $region32
        $region31: #{tpu_custom_call.1} parent=19 // pred_region
          %s305 = sand.u32 %s29, 1
          %s306 = scalar_lea.sflag [#allocation8], %s305
          %s307 = sand.u32 %s124, 1
          %s308 = smul.addr %s307, 128
          %s309 = scalar_lea.vmem [#allocation9], %s308
          %s311 = ssub.s32 2048, 2048
          %312 = vsyncadd %s306, %s311
          %s313 = smul.addr %s37, 128
          %s314 = scalar_lea.hbm %s3, %s313
          %s315 = sshll.u32 %s309, 4
          %s316 = int_to_ptr.vmem [resolvable:$true] %s315
          %321 = dma.hbm_to_vmem [thread:$0]  %s314, 2048, %s316, %s306, 256, 128, 8
        $region32: #{tpu_custom_call.1} parent=19 // pred_fallthru
          _
        // Predicated region
        $region33: #{tpu_custom_call.1} parent=19 // pred_check
          %p322 = pneg %p160
        $region34: #{tpu_custom_call.1} parent=19 // pred_check_branch
          %324 = sbr.rel (%p322) target = $region36
        $region35: #{tpu_custom_call.1} parent=19 // pred_region
          %s325 = sand.u32 %s29, 1
          %s326 = scalar_lea.sflag [#allocation11], %s325
          %s327 = sand.u32 %s150, 1
          %s328 = smul.addr %s327, 128
          %s329 = scalar_lea.vmem [#allocation10], %s328
          %s331 = ssub.s32 2048, 2048
          %332 = vsyncadd %s326, %s331
          %s333 = smul.addr %s37, 128
          %s334 = scalar_lea.hbm %s4, %s333
          %s335 = sshll.u32 %s329, 4
          %s336 = int_to_ptr.vmem [resolvable:$true] %s335
          %341 = dma.hbm_to_vmem [thread:$0]  %s334, 2048, %s336, %s326, 256, 128, 8
        $region36: #{tpu_custom_call.1} parent=19 // pred_fallthru
          _
        // Predicated region
        $region37: #{tpu_custom_call.1} parent=19 // pred_check
          %p342 = pneg %p186
        $region38: #{tpu_custom_call.1} parent=19 // pred_check_branch
          %344 = sbr.rel (%p342) target = $region40
        $region39: #{tpu_custom_call.1} parent=19 // pred_region
          %s345 = sand.u32 %s29, 1
          %s346 = scalar_lea.sflag [#allocation11], %s345
          %s347 = sand.u32 %s176, 1
          %s348 = smul.addr %s347, 128
          %s349 = scalar_lea.vmem [#allocation12], %s348
          %s350 = smul.u32 16, %s37
          %s352 = ssub.s32 2048, 2048
          %353 = vsyncadd %s346, %s352
          %s354 = smul.addr %s350, 128
          %s355 = scalar_lea.hbm %s5, %s354
          %s356 = sshll.u32 %s349, 4
          %s357 = int_to_ptr.vmem [resolvable:$true] %s356
          %362 = dma.hbm_to_vmem [thread:$0]  %s355, 2048, %s357, %s346, 128, 128, 8
        $region40: #{tpu_custom_call.1} parent=19 // pred_fallthru
          _
      $region20: #{tpu_custom_call.1} parent=5 // pred_fallthru
        _
      %p363 = scmp.le.s32.totalorder 1, %s29
      %p364 = scmp.lt.s32.totalorder %s29, 5
      %p365 = pnand %p363, %p364
      %p366 = pneg %p365
      // Predicated region
      $region41: #{tpu_custom_call.1} parent=5 // pred_check
        _
      $region42: #{tpu_custom_call.1} parent=5 // pred_check_branch
        %368 = sbr.rel (%p365) target = $region44
      $region43: #{tpu_custom_call.1} parent=5 // pred_region
        %s369 = ssub.s32 %s29, 1
        %s370 = sand.u32 %s54, 1
        %s371 = scalar_lea.sflag [#allocation5], %s370
        %s372 = sand.u32 %s54, 1
        %s373 = smul.addr %s372, 8
        %s374 = scalar_lea.vmem [#allocation4], %s373
        // Predicated region
        $region45: #{tpu_custom_call.1} parent=43 // pred_check
          %p375 = pneg %p67
        $region46: #{tpu_custom_call.1} parent=43 // pred_check_branch
          %377 = sbr.rel (%p375) target = $region48
        $region47: #{tpu_custom_call.1} parent=43 // pred_region
          %378 = dma.done %s371, 128
        $region48: #{tpu_custom_call.1} parent=43 // pred_fallthru
          _
        %s379 = sand.u32 %s34, 1
        %s380 = scalar_lea.sflag [#allocation8], %s379
        %s381 = sand.u32 %s80, 1
        %s382 = smul.addr %s381, 8
        %s383 = scalar_lea.vmem [#allocation7], %s382
        // Predicated region
        $region49: #{tpu_custom_call.1} parent=43 // pred_check
          %p384 = pneg %p93
        $region50: #{tpu_custom_call.1} parent=43 // pred_check_branch
          %386 = sbr.rel (%p384) target = $region52
        $region51: #{tpu_custom_call.1} parent=43 // pred_region
          %387 = dma.done %s380, 128
        $region52: #{tpu_custom_call.1} parent=43 // pred_fallthru
          _
        %s388 = sand.u32 %s34, 1
        %s389 = scalar_lea.sflag [#allocation8], %s388
        %s390 = sand.u32 %s127, 1
        %s391 = smul.addr %s390, 128
        %s392 = scalar_lea.vmem [#allocation9], %s391
        // Predicated region
        $region53: #{tpu_custom_call.1} parent=43 // pred_check
          %p393 = pneg %p140
        $region54: #{tpu_custom_call.1} parent=43 // pred_check_branch
          %395 = sbr.rel (%p393) target = $region56
        $region55: #{tpu_custom_call.1} parent=43 // pred_region
          %396 = dma.done %s389, 2048
        $region56: #{tpu_custom_call.1} parent=43 // pred_fallthru
          _
        %s397 = sand.u32 %s34, 1
        %s398 = scalar_lea.sflag [#allocation11], %s397
        %s399 = sand.u32 %s153, 1
        %s400 = smul.addr %s399, 128
        %s401 = scalar_lea.vmem [#allocation10], %s400
        // Predicated region
        $region57: #{tpu_custom_call.1} parent=43 // pred_check
          %p402 = pneg %p166
        $region58: #{tpu_custom_call.1} parent=43 // pred_check_branch
          %404 = sbr.rel (%p402) target = $region60
        $region59: #{tpu_custom_call.1} parent=43 // pred_region
          %405 = dma.done %s398, 2048
        $region60: #{tpu_custom_call.1} parent=43 // pred_fallthru
          _
        %s406 = sand.u32 %s34, 1
        %s407 = scalar_lea.sflag [#allocation11], %s406
        %s408 = sand.u32 %s179, 1
        %s409 = smul.addr %s408, 128
        %s410 = scalar_lea.vmem [#allocation12], %s409
        // Predicated region
        $region61: #{tpu_custom_call.1} parent=43 // pred_check
          %p411 = pneg %p192
        $region62: #{tpu_custom_call.1} parent=43 // pred_check_branch
          %413 = sbr.rel (%p411) target = $region64
        $region63: #{tpu_custom_call.1} parent=43 // pred_region
          %414 = dma.done %s407, 2048
        $region64: #{tpu_custom_call.1} parent=43 // pred_fallthru
          _
        %s415 = sand.u32 %s54, 1
        %s416 = scalar_lea.sflag [#allocation5], %s415
        %s417 = sand.u32 %s54, 1
        %s418 = smul.addr %s417, 8
        %s419 = scalar_lea.vmem [#allocation4], %s418
        %p420 = pneg %p67
        %p421 = pneg %p64
        %s422 = sand.u32 %s34, 1
        %s423 = scalar_lea.sflag [#allocation8], %s422
        %s424 = sand.u32 %s80, 1
        %s425 = smul.addr %s424, 8
        %s426 = scalar_lea.vmem [#allocation7], %s425
        %p427 = pneg %p93
        %p428 = pneg %p90
        %p429 = pneg %p114
        %p430 = pneg %p111
        %s431 = sand.u32 %s34, 1
        %s432 = scalar_lea.sflag [#allocation8], %s431
        %s433 = sand.u32 %s127, 1
        %s434 = smul.addr %s433, 128
        %s435 = scalar_lea.vmem [#allocation9], %s434
        %p436 = pneg %p140
        %p437 = pneg %p137
        %s438 = sand.u32 %s34, 1
        %s439 = scalar_lea.sflag [#allocation11], %s438
        %s440 = sand.u32 %s153, 1
        %s441 = smul.addr %s440, 128
        %s442 = scalar_lea.vmem [#allocation10], %s441
        %p443 = pneg %p166
        %p444 = pneg %p163
        %s445 = sand.u32 %s34, 1
        %s446 = scalar_lea.sflag [#allocation11], %s445
        %s447 = sand.u32 %s179, 1
        %s448 = smul.addr %s447, 128
        %s449 = scalar_lea.vmem [#allocation12], %s448
        %p450 = pneg %p192
        %p451 = pneg %p189
        %p452 = pneg %p218
        %p453 = pneg %p215
        %s454 = sand.u32 %s205, 1
        %s455 = scalar_lea.sflag [#allocation6], %s454
        %s456 = sand.u32 %s205, 1
        %s457 = smul.addr %s456, 8
        %s458 = scalar_lea.vmem [#allocation13], %s457
        %p459 = pneg %p244
        %p460 = pneg %p241
        %s461 = sand.u32 %s231, 1
        %s462 = scalar_lea.sflag [#allocation15], %s461
        %s463 = sand.u32 %s231, 1
        %s464 = smul.addr %s463, 8
        %s465 = scalar_lea.vmem [#allocation14], %s464
        %s466 = smul.u32 16, %s39
        %p467 = scmp.eq.s32.totalorder %s39, 0
        // Predicated region
        $region65: #{tpu_custom_call.1} parent=43 // pred_check
          %p468 = pneg %p467
        $region66: #{tpu_custom_call.1} parent=43 // pred_check_branch
          %470 = sbr.rel (%p468) target = $region68
        $region67: #{tpu_custom_call.1} parent=43 // pred_region
          %471 = vst [vmem:[#allocation3] sm:$0xff] 0.0
          %v472 = vld [vmem:[%s374] sm:$0xff]
          %v473 = vld [vmem:[%s383] sm:$0xff]
          %v474 = vadd.f32 %v472, %v473
          %475 = vst [vmem:[%s465] sm:$0xff] %v474
          %v476 = vmul.f32 %v474, %v474
          %477 = vadd.xlane.f32.xlu0 %v476
          %v478 = vpop.xlane.xlu0 %477
          %v479 = vmul.f32 %v478, 0.0078125
          %v480 = vadd.f32 %v479, 1e-05
          %v481 = vrsqrt.pop %v480
          %v482 = vmul.f32 %v474, %v481
          %v483 = vld [vmem:[%s2] sm:$0x1]
          %v485 = vlaneseq
          %v486 = vshrl.u32 %v485, 7
          %v487 = vsub.s32 0, %v486
          %v488 = vrot.slane %v483, %v487
          %v490 = vmul.f32 %v482, %v488
          %491 = vst [vmem:[#allocation2] sm:$0xff] %v490
        $region68: #{tpu_custom_call.1} parent=43 // pred_fallthru
          _
        %v492 = vld [vmem:[#allocation2] sm:$0xff]
        %v493 = vld [vmem:[%s392] sm:$0xff]
        %v494 = vld [vmem:[%s392 + $0x8] sm:$0xff]
        %v495 = vld [vmem:[%s392 + $0x10] sm:$0xff]
        %v496 = vld [vmem:[%s392 + $0x18] sm:$0xff]
        %v497 = vld [vmem:[%s392 + $0x20] sm:$0xff]
        %v498 = vld [vmem:[%s392 + $0x28] sm:$0xff]
        %v499 = vld [vmem:[%s392 + $0x30] sm:$0xff]
        %v500 = vld [vmem:[%s392 + $0x38] sm:$0xff]
        %v501 = vld [vmem:[%s392 + $0x40] sm:$0xff]
        %v502 = vld [vmem:[%s392 + $0x48] sm:$0xff]
        %v503 = vld [vmem:[%s392 + $0x50] sm:$0xff]
        %v504 = vld [vmem:[%s392 + $0x58] sm:$0xff]
        %v505 = vld [vmem:[%s392 + $0x60] sm:$0xff]
        %v506 = vld [vmem:[%s392 + $0x68] sm:$0xff]
        %v507 = vld [vmem:[%s392 + $0x70] sm:$0xff]
        %v508 = vld [vmem:[%s392 + $0x78] sm:$0xff]
        %509 = vmatprep.subr.mxu0 0.0
        %510 = vmatpush1.msra.mxu0 %v493
        %511 = vmatprep.subr.mxu0 0.0
        %512 = vmatpush1.msra.mxu0 %v494
        %513 = vmatprep.subr.mxu0 0.0
        %514 = vmatpush1.msra.mxu0 %v495
        %515 = vmatprep.subr.mxu0 0.0
        %516 = vmatpush1.msra.mxu0 %v496
        %517 = vmatprep.subr.mxu0 0.0
        %518 = vmatpush1.msra.mxu0 %v497
        %519 = vmatprep.subr.mxu0 0.0
        %520 = vmatpush1.msra.mxu0 %v498
        %521 = vmatprep.subr.mxu0 0.0
        %522 = vmatpush1.msra.mxu0 %v499
        %523 = vmatprep.subr.mxu0 0.0
        %524 = vmatpush1.msra.mxu0 %v500
        %525 = vmatprep.subr.mxu0 0.0
        %526 = vmatpush1.msra.mxu0 %v501
        %527 = vmatprep.subr.mxu0 0.0
        %528 = vmatpush1.msra.mxu0 %v502
        %529 = vmatprep.subr.mxu0 0.0
        %530 = vmatpush1.msra.mxu0 %v503
        %531 = vmatprep.subr.mxu0 0.0
        %532 = vmatpush1.msra.mxu0 %v504
        %533 = vmatprep.subr.mxu0 0.0
        %534 = vmatpush1.msra.mxu0 %v505
        %535 = vmatprep.subr.mxu0 0.0
        %536 = vmatpush1.msra.mxu0 %v506
        %537 = vmatprep.subr.mxu0 0.0
        %538 = vmatpush1.msra.mxu0 %v507
        %539 = vmatprep.subr.mxu0 0.0
        %540 = vmatpush1.msra.mxu0 %v508
        %541 = vmatprep.subr.mxu0 0.0
        %542 = vmatpush1.msra.mxu0 0.0
        %543 = vmatprep.subr.mxu0 0.0
        %544 = vmatpush1.msra.mxu0 0.0
        %545 = vmatprep.subr.mxu0 0.0
        %546 = vmatpush1.msra.mxu0 0.0
        %547 = vmatprep.subr.mxu0 0.0
        %548 = vmatpush1.msra.mxu0 0.0
        %549 = vmatprep.subr.mxu0 0.0
        %550 = vmatpush1.msra.mxu0 0.0
        %551 = vmatprep.subr.mxu0 0.0
        %552 = vmatpush1.msra.mxu0 0.0
        %553 = vmatprep.subr.mxu0 0.0
        %554 = vmatpush1.msra.mxu0 0.0
        %555 = vmatprep.subr.mxu0 0.0
        %556 = vmatpush1.msra.mxu0 0.0
        %557 = vmatprep.subr.mxu0 0.0
        %558 = vmatpush1.msra.mxu0 0.0
        %559 = vmatprep.subr.mxu0 0.0
        %560 = vmatpush1.msra.mxu0 0.0
        %561 = vmatprep.subr.mxu0 0.0
        %562 = vmatpush1.msra.mxu0 0.0
        %563 = vmatprep.subr.mxu0 0.0
        %564 = vmatpush1.msra.mxu0 0.0
        %565 = vmatprep.subr.mxu0 0.0
        %566 = vmatpush1.msra.mxu0 0.0
        %567 = vmatprep.subr.mxu0 0.0
        %568 = vmatpush1.msra.mxu0 0.0
        %569 = vmatprep.subr.mxu0 0.0
        %570 = vmatpush1.msra.mxu0 0.0
        %571 = vmatprep.subr.mxu0 0.0
        %572 = vmatpush1.msra.mxu0 0.0
        %573 = vmatprep.mubr.f32.mxu0 0.0
        %574 = vmatmul.mubr.f32.gmra.mrb[0].mxu0 %v492
        %v575 = vpop.f32.mrb[0].mxu0
        %v576 = vadd.f32 0.0, %v575
        %v577 = vpop.f32.mrb[0].mxu0
        %578 = vdwg.mxu0
        %v579 = vld [vmem:[%s401] sm:$0xff]
        %v580 = vld [vmem:[%s401 + $0x8] sm:$0xff]
        %v581 = vld [vmem:[%s401 + $0x10] sm:$0xff]
        %v582 = vld [vmem:[%s401 + $0x18] sm:$0xff]
        %v583 = vld [vmem:[%s401 + $0x20] sm:$0xff]
        %v584 = vld [vmem:[%s401 + $0x28] sm:$0xff]
        %v585 = vld [vmem:[%s401 + $0x30] sm:$0xff]
        %v586 = vld [vmem:[%s401 + $0x38] sm:$0xff]
        %v587 = vld [vmem:[%s401 + $0x40] sm:$0xff]
        %v588 = vld [vmem:[%s401 + $0x48] sm:$0xff]
        %v589 = vld [vmem:[%s401 + $0x50] sm:$0xff]
        %v590 = vld [vmem:[%s401 + $0x58] sm:$0xff]
        %v591 = vld [vmem:[%s401 + $0x60] sm:$0xff]
        %v592 = vld [vmem:[%s401 + $0x68] sm:$0xff]
        %v593 = vld [vmem:[%s401 + $0x70] sm:$0xff]
        %v594 = vld [vmem:[%s401 + $0x78] sm:$0xff]
        %595 = vmatprep.subr.mxu0 0.0
        %596 = vmatpush1.msra.mxu0 %v579
        %597 = vmatprep.subr.mxu0 0.0
        %598 = vmatpush1.msra.mxu0 %v580
        %599 = vmatprep.subr.mxu0 0.0
        %600 = vmatpush1.msra.mxu0 %v581
        %601 = vmatprep.subr.mxu0 0.0
        %602 = vmatpush1.msra.mxu0 %v582
        %603 = vmatprep.subr.mxu0 0.0
        %604 = vmatpush1.msra.mxu0 %v583
        %605 = vmatprep.subr.mxu0 0.0
        %606 = vmatpush1.msra.mxu0 %v584
        %607 = vmatprep.subr.mxu0 0.0
        %608 = vmatpush1.msra.mxu0 %v585
        %609 = vmatprep.subr.mxu0 0.0
        %610 = vmatpush1.msra.mxu0 %v586
        %611 = vmatprep.subr.mxu0 0.0
        %612 = vmatpush1.msra.mxu0 %v587
        %613 = vmatprep.subr.mxu0 0.0
        %614 = vmatpush1.msra.mxu0 %v588
        %615 = vmatprep.subr.mxu0 0.0
        %616 = vmatpush1.msra.mxu0 %v589
        %617 = vmatprep.subr.mxu0 0.0
        %618 = vmatpush1.msra.mxu0 %v590
        %619 = vmatprep.subr.mxu0 0.0
        %620 = vmatpush1.msra.mxu0 %v591
        %621 = vmatprep.subr.mxu0 0.0
        %622 = vmatpush1.msra.mxu0 %v592
        %623 = vmatprep.subr.mxu0 0.0
        %624 = vmatpush1.msra.mxu0 %v593
        %625 = vmatprep.subr.mxu0 0.0
        %626 = vmatpush1.msra.mxu0 %v594
        %627 = vmatprep.subr.mxu0 0.0
        %628 = vmatpush1.msra.mxu0 0.0
        %629 = vmatprep.subr.mxu0 0.0
        %630 = vmatpush1.msra.mxu0 0.0
        %631 = vmatprep.subr.mxu0 0.0
        %632 = vmatpush1.msra.mxu0 0.0
        %633 = vmatprep.subr.mxu0 0.0
        %634 = vmatpush1.msra.mxu0 0.0
        %635 = vmatprep.subr.mxu0 0.0
        %636 = vmatpush1.msra.mxu0 0.0
        %637 = vmatprep.subr.mxu0 0.0
        %638 = vmatpush1.msra.mxu0 0.0
        %639 = vmatprep.subr.mxu0 0.0
        %640 = vmatpush1.msra.mxu0 0.0
        %641 = vmatprep.subr.mxu0 0.0
        %642 = vmatpush1.msra.mxu0 0.0
        %643 = vmatprep.subr.mxu0 0.0
        %644 = vmatpush1.msra.mxu0 0.0
        %645 = vmatprep.subr.mxu0 0.0
        %646 = vmatpush1.msra.mxu0 0.0
        %647 = vmatprep.subr.mxu0 0.0
        %648 = vmatpush1.msra.mxu0 0.0
        %649 = vmatprep.subr.mxu0 0.0
        %650 = vmatpush1.msra.mxu0 0.0
        %651 = vmatprep.subr.mxu0 0.0
        %652 = vmatpush1.msra.mxu0 0.0
        %653 = vmatprep.subr.mxu0 0.0
        %654 = vmatpush1.msra.mxu0 0.0
        %655 = vmatprep.subr.mxu0 0.0
        %656 = vmatpush1.msra.mxu0 0.0
        %657 = vmatprep.subr.mxu0 0.0
        %658 = vmatpush1.msra.mxu0 0.0
        %659 = vmatprep.mubr.f32.mxu0 0.0
        %660 = vmatmul.mubr.f32.gmra.mrb[0].mxu0 %v492
        %v661 = vpop.f32.mrb[0].mxu0
        %v662 = vadd.f32 0.0, %v661
        %v663 = vpop.f32.mrb[0].mxu0
        %664 = vdwg.mxu0
        %v665 = vxor.u32 %v576, 2147483648
        %v666 = vmul.f32 %v665, 1.442695
        %v667 = vpow.pop %v666
        %v668 = vadd.f32 %v667, 1.0
        %v669 = vrcp.pop %v668
        %v670 = vmul.f32 1.0, %v669
        %v671 = vmul.f32 %v576, %v670
        %v672 = vmul.f32 %v671, %v662
        %v673 = vld [vmem:[#allocation3] sm:$0xff]
        %v674 = vld [vmem:[%s410] sm:$0xff]
        %v675 = vld [vmem:[%s410 + $0x8] sm:$0xff]
        %v676 = vld [vmem:[%s410 + $0x10] sm:$0xff]
        %v677 = vld [vmem:[%s410 + $0x18] sm:$0xff]
        %v678 = vld [vmem:[%s410 + $0x20] sm:$0xff]
        %v679 = vld [vmem:[%s410 + $0x28] sm:$0xff]
        %v680 = vld [vmem:[%s410 + $0x30] sm:$0xff]
        %v681 = vld [vmem:[%s410 + $0x38] sm:$0xff]
        %v682 = vld [vmem:[%s410 + $0x40] sm:$0xff]
        %v683 = vld [vmem:[%s410 + $0x48] sm:$0xff]
        %v684 = vld [vmem:[%s410 + $0x50] sm:$0xff]
        %v685 = vld [vmem:[%s410 + $0x58] sm:$0xff]
        %v686 = vld [vmem:[%s410 + $0x60] sm:$0xff]
        %v687 = vld [vmem:[%s410 + $0x68] sm:$0xff]
        %v688 = vld [vmem:[%s410 + $0x70] sm:$0xff]
        %v689 = vld [vmem:[%s410 + $0x78] sm:$0xff]
        %690 = vmatprep.subr.mxu0 0.0
        %691 = vmatpush1.msra.mxu0 %v674
        %692 = vmatprep.subr.mxu0 0.0
        %693 = vmatpush1.msra.mxu0 %v675
        %694 = vmatprep.subr.mxu0 0.0
        %695 = vmatpush1.msra.mxu0 %v676
        %696 = vmatprep.subr.mxu0 0.0
        %697 = vmatpush1.msra.mxu0 %v677
        %698 = vmatprep.subr.mxu0 0.0
        %699 = vmatpush1.msra.mxu0 %v678
        %700 = vmatprep.subr.mxu0 0.0
        %701 = vmatpush1.msra.mxu0 %v679
        %702 = vmatprep.subr.mxu0 0.0
        %703 = vmatpush1.msra.mxu0 %v680
        %704 = vmatprep.subr.mxu0 0.0
        %705 = vmatpush1.msra.mxu0 %v681
        %706 = vmatprep.subr.mxu0 0.0
        %707 = vmatpush1.msra.mxu0 %v682
        %708 = vmatprep.subr.mxu0 0.0
        %709 = vmatpush1.msra.mxu0 %v683
        %710 = vmatprep.subr.mxu0 0.0
        %711 = vmatpush1.msra.mxu0 %v684
        %712 = vmatprep.subr.mxu0 0.0
        %713 = vmatpush1.msra.mxu0 %v685
        %714 = vmatprep.subr.mxu0 0.0
        %715 = vmatpush1.msra.mxu0 %v686
        %716 = vmatprep.subr.mxu0 0.0
        %717 = vmatpush1.msra.mxu0 %v687
        %718 = vmatprep.subr.mxu0 0.0
        %719 = vmatpush1.msra.mxu0 %v688
        %720 = vmatprep.subr.mxu0 0.0
        %721 = vmatpush1.msra.mxu0 %v689
        %722 = vmatprep.subr.mxu0 0.0
        %723 = vmatpush1.msra.mxu0 0.0
        %724 = vmatprep.subr.mxu0 0.0
        %725 = vmatpush1.msra.mxu0 0.0
        %726 = vmatprep.subr.mxu0 0.0
        %727 = vmatpush1.msra.mxu0 0.0
        %728 = vmatprep.subr.mxu0 0.0
        %729 = vmatpush1.msra.mxu0 0.0
        %730 = vmatprep.subr.mxu0 0.0
        %731 = vmatpush1.msra.mxu0 0.0
        %732 = vmatprep.subr.mxu0 0.0
        %733 = vmatpush1.msra.mxu0 0.0
        %734 = vmatprep.subr.mxu0 0.0
        %735 = vmatpush1.msra.mxu0 0.0
        %736 = vmatprep.subr.mxu0 0.0
        %737 = vmatpush1.msra.mxu0 0.0
        %738 = vmatprep.subr.mxu0 0.0
        %739 = vmatpush1.msra.mxu0 0.0
        %740 = vmatprep.subr.mxu0 0.0
        %741 = vmatpush1.msra.mxu0 0.0
        %742 = vmatprep.subr.mxu0 0.0
        %743 = vmatpush1.msra.mxu0 0.0
        %744 = vmatprep.subr.mxu0 0.0
        %745 = vmatpush1.msra.mxu0 0.0
        %746 = vmatprep.subr.mxu0 0.0
        %747 = vmatpush1.msra.mxu0 0.0
        %748 = vmatprep.subr.mxu0 0.0
        %749 = vmatpush1.msra.mxu0 0.0
        %750 = vmatprep.subr.mxu0 0.0
        %751 = vmatpush1.msra.mxu0 0.0
        %752 = vmatprep.subr.mxu0 0.0
        %753 = vmatpush1.msra.mxu0 0.0
        %754 = vmatprep.mubr.f32.mxu0 0.0
        %755 = vmatmul.mubr.f32.gmra.mrb[0].mxu0 %v672
        %v756 = vpop.f32.mrb[0].mxu0
        %v757 = vadd.f32 0.0, %v756
        %v758 = vpop.f32.mrb[0].mxu0
        %759 = vdwg.mxu0
        %v760 = vadd.f32 %v673, %v757
        %761 = vst [vmem:[#allocation3] sm:$0xff] %v760
        %p762 = scmp.eq.s32.totalorder %s39, 1
        // Predicated region
        $region69: #{tpu_custom_call.1} parent=43 // pred_check
          %p763 = pneg %p762
        $region70: #{tpu_custom_call.1} parent=43 // pred_check_branch
          %765 = sbr.rel (%p763) target = $region72
        $region71: #{tpu_custom_call.1} parent=43 // pred_region
          %v766 = vld [vmem:[#allocation3] sm:$0xff]
          %767 = vst [vmem:[%s458] sm:$0xff] %v766
        $region72: #{tpu_custom_call.1} parent=43 // pred_fallthru
          _
        %s768 = sand.u32 %s205, 1
        %s769 = scalar_lea.sflag [#allocation6], %s768
        %s770 = sand.u32 %s205, 1
        %s771 = smul.addr %s770, 8
        %s772 = scalar_lea.vmem [#allocation13], %s771
        %s773 = sand.u32 %s231, 1
        %s774 = scalar_lea.sflag [#allocation15], %s773
        %s775 = sand.u32 %s231, 1
        %s776 = smul.addr %s775, 8
        %s777 = scalar_lea.vmem [#allocation14], %s776
        // Predicated region
        $region73: #{tpu_custom_call.1} parent=43 // pred_check
          %p778 = pneg %p215
        $region74: #{tpu_custom_call.1} parent=43 // pred_check_branch
          %780 = sbr.rel (%p778) target = $region76
        $region75: #{tpu_custom_call.1} parent=43 // pred_region
          %s782 = ssub.s32 128, 128
          %783 = vsyncadd %s769, %s782
          %s784 = smul.addr %s38, 128
          %s785 = scalar_lea.hbm %s6, %s784
          %s787 = sshll.u32 %s772, 4
          %s788 = int_to_ptr.vmem [resolvable:$true] %s787
          %790 = dma.vmem_to_hbm [thread:$0]  %s788, 128, %s785, %s769
        $region76: #{tpu_custom_call.1} parent=43 // pred_fallthru
          _
        // Predicated region
        $region77: #{tpu_custom_call.1} parent=43 // pred_check
          %p791 = pneg %p241
        $region78: #{tpu_custom_call.1} parent=43 // pred_check_branch
          %793 = sbr.rel (%p791) target = $region80
        $region79: #{tpu_custom_call.1} parent=43 // pred_region
          %s795 = ssub.s32 128, 128
          %796 = vsyncadd %s774, %s795
          %s797 = smul.addr %s38, 128
          %s798 = scalar_lea.hbm %s7, %s797
          %s800 = sshll.u32 %s777, 4
          %s801 = int_to_ptr.vmem [resolvable:$true] %s800
          %803 = dma.vmem_to_hbm [thread:$0]  %s801, 128, %s798, %s774
        $region80: #{tpu_custom_call.1} parent=43 // pred_fallthru
          _
      $region44: #{tpu_custom_call.1} parent=5 // pred_fallthru
        _
      %p804 = scmp.le.s32.totalorder 2, %s29
      // Predicated region
      $region81: #{tpu_custom_call.1} parent=5 // pred_check
        %p805 = pneg %p804
      $region82: #{tpu_custom_call.1} parent=5 // pred_check_branch
        %807 = sbr.rel (%p805) target = $region84
      $region83: #{tpu_custom_call.1} parent=5 // pred_region
        %s808 = ssub.s32 %s29, 2
        // Predicated region
        $region85: #{tpu_custom_call.1} parent=83 // pred_check
          %p809 = pneg %p221
        $region86: #{tpu_custom_call.1} parent=83 // pred_check_branch
          %811 = sbr.rel (%p809) target = $region88
        $region87: #{tpu_custom_call.1} parent=83 // pred_region
          %s812 = sand.u32 %s206, 1
          %s813 = scalar_lea.sflag [#allocation6], %s812
          %s814 = sand.u32 %s206, 1
          %s815 = smul.addr %s814, 8
          %s816 = scalar_lea.vmem [#allocation13], %s815
          %817 = dma.done %s813, 128
        $region88: #{tpu_custom_call.1} parent=83 // pred_fallthru
          _
        // Predicated region
        $region89: #{tpu_custom_call.1} parent=83 // pred_check
          %p818 = pneg %p247
        $region90: #{tpu_custom_call.1} parent=83 // pred_check_branch
          %820 = sbr.rel (%p818) target = $region92
        $region91: #{tpu_custom_call.1} parent=83 // pred_region
          %s821 = sand.u32 %s232, 1
          %s822 = scalar_lea.sflag [#allocation15], %s821
          %s823 = sand.u32 %s232, 1
          %s824 = smul.addr %s823, 8
          %s825 = scalar_lea.vmem [#allocation14], %s824
          %826 = dma.done %s822, 128
        $region92: #{tpu_custom_call.1} parent=83 // pred_fallthru
          _
      $region84: #{tpu_custom_call.1} parent=5 // pred_fallthru
        _
    $region6: #{tpu_custom_call.1} parent=1 // loop_footer
      %s33 = sadd.s32 1, %s29
    $region7: #{tpu_custom_call.1} parent=1 // loop_footer_branch
      %28 = sbr.rel target = $region3
    $region8: #{tpu_custom_call.1} parent=1 // loop_exit
      _
    %827 = vsyncpa [#allocation5], 1
    %s828 = scalar_lea.sflag [#allocation5], 1
    %829 = vsyncpa %s828, 1
    %830 = vsyncpa [#allocation8], 1
    %s831 = scalar_lea.sflag [#allocation8], 1
    %832 = vsyncpa %s831, 1
    %833 = vsyncpa [#allocation11], 1
    %s834 = scalar_lea.sflag [#allocation11], 1
    %835 = vsyncpa %s834, 1
    %836 = vsyncpa [#allocation6], 1
    %s837 = scalar_lea.sflag [#allocation6], 1
    %838 = vsyncpa %s837, 1
    %839 = vsyncpa [#allocation15], 1
    %s840 = scalar_lea.sflag [#allocation15], 1
    %841 = vsyncpa %s840, 1

</llo_original>
